<compile_context>
chip_gen: v7x
topology: tpu7x:2x2x1
jax: 0.10.0
libtpu: 0.0.40
codegen_flags: <defaults>
</compile_context>

<pallas_src>
from typing import NamedTuple

import jax
import jax.numpy as jnp
from jax.experimental import pallas as pl
from jax.experimental.pallas import tpu as pltpu


# --------------------------------------------------------------------------- #
# Kernels
# --------------------------------------------------------------------------- #

def _blockfc_eval_kernel(x_ref, w_ref, b_ref, o_ref, acc_ref):
    # NOTE: program_id / num_programs are evaluated at the kernel top level
    # (never inside a pl.when body) so the kernel also works in interpret mode.
    k = pl.program_id(2)
    k_last = pl.num_programs(2) - 1

    @pl.when(k == 0)
    def _init():
        # Fold the bias into the accumulator init: saves a (tm, tn) VPU add in
        # the epilogue of every output tile.
        acc_ref[...] = jnp.broadcast_to(b_ref[...], acc_ref.shape)

    # bf16 x bf16 -> fp32 on the MXU; fp32 VMEM accumulator.
    acc_ref[...] += jnp.dot(x_ref[...], w_ref[...],
                            preferred_element_type=jnp.float32)

    @pl.when(k == k_last)
    def _epilogue():
        # ReLU; Dropout is identity in eval mode.
        o_ref[...] = jnp.maximum(acc_ref[...], 0.0).astype(o_ref.dtype)


def _blockfc_train_kernel(x_ref, w_ref, b_ref, m_ref, o_ref, acc_ref):
    k = pl.program_id(2)
    k_last = pl.num_programs(2) - 1

    @pl.when(k == 0)
    def _init():
        acc_ref[...] = jnp.broadcast_to(b_ref[...], acc_ref.shape)

    acc_ref[...] += jnp.dot(x_ref[...], w_ref[...],
                            preferred_element_type=jnp.float32)

    @pl.when(k == k_last)
    def _epilogue():
        y = jnp.maximum(acc_ref[...], 0.0)
        # Inverted dropout: m_ref holds 0.0 (dropped) or 1/(1-p) (kept).
        o_ref[...] = (y * m_ref[...]).astype(o_ref.dtype)


# --------------------------------------------------------------------------- #
# Planning / parameter preparation (pay pad + transpose + bf16 cast once)
# --------------------------------------------------------------------------- #

def _cdiv(a, b):
    return (a + b - 1) // b


def _round_up(x, m):
    return _cdiv(x, m) * m


class Plan(NamedTuple):
    tm: int
    tn: int
    tk: int
    Mp: int
    Np: int
    Kp: int


class Params(NamedTuple):
    wt: jax.Array   # (Kp, Np), compute dtype, contraction on dim 0
    b: jax.Array    # (1, Np), float32


def make_plan(B, in_f, out_f, tm=512, tn=512, tk=1024):
    tm = min(tm, _round_up(B, 8))
    tn = min(tn, _round_up(out_f, 128))
    tk = min(tk, _round_up(in_f, 128))

    # v7x megacore: if the (parallel) M axis collapses to a single tile, try to
    # give the (parallel) N axis >= 2 steps so the second TensorCore has work.
    if _round_up(B, tm) // tm == 1:
        n128 = _round_up(out_f, 128)
        if n128 >= 256 and tn >= n128:
            tn = max(128, ((n128 // 2) // 128) * 128)

    Mp = _round_up(B, tm)
    Np = _round_up(out_f, tn)
    Kp = _round_up(in_f, tk)
    return Plan(tm, tn, tk, Mp, Np, Kp)


def prepare_params(weight, bias, plan, compute_dtype=jnp.bfloat16):
    """Pad + transpose + cast the (static) parameters once.

    weight: (out_f, in_f) PyTorch nn.Linear layout. Returned as (Kp, Np) in
    compute_dtype so the kernel contracts standard dims with no per-k-step
    transposed RHS feed.
    """
    out_f, in_f = weight.shape
    wp = weight
    if plan.Np != out_f or plan.Kp != in_f:
        wp = jnp.pad(weight, ((0, plan.Np - out_f), (0, plan.Kp - in_f)))
    wt = wp.T.astype(compute_dtype)                       # (Kp, Np)

    bp = bias
    if plan.Np != out_f:
        bp = jnp.pad(bias, (0, plan.Np - out_f))
    bp = bp.reshape(1, plan.Np).astype(jnp.float32)
    return Params(wt, bp)


def _vmem_limit_bytes():
    # ~25% headroom below physical VMEM; v5e/v6e = 128 MiB, v7x = 64 MiB.
    cap = 64 * 1024 * 1024
    try:
        info = pltpu.get_tpu_info()
        cap = int(getattr(info, "vmem_capacity_bytes", cap))
    except Exception:
        pass
    return min(cap * 3 // 4, 96 * 1024 * 1024)


# --------------------------------------------------------------------------- #
# Wrapper
# --------------------------------------------------------------------------- #

def block_fc(x, weight, bias, *, training=False, p=0.5, rng_key=None,
             tm=512, tn=512, tk=1024, compute_dtype=jnp.bfloat16,
             plan=None, params=None):
    """Forward of BlockFC: Linear(in->out) -> ReLU -> Dropout(p).

    x:      (B, in_features)
    weight: (out_features, in_features)  (PyTorch nn.Linear layout)
    bias:   (out_features,)

    Pass `plan`/`params` (from make_plan / prepare_params) to amortize the
    one-time weight pad/transpose/cast across calls.
    """
    B, in_f = x.shape
    out_f = weight.shape[0]
    out_dtype = x.dtype

    if plan is None:
        plan = make_plan(B, in_f, out_f, tm, tn, tk)
    if params is None:
        params = prepare_params(weight, bias, plan, compute_dtype)

    # Pad the activations only if needed (skips an HBM pass when aligned).
    xp = x
    if plan.Mp != B or plan.Kp != in_f:
        xp = jnp.pad(x, ((0, plan.Mp - B), (0, plan.Kp - in_f)))
    if xp.dtype != params.wt.dtype:
        xp = xp.astype(params.wt.dtype)

    grid = (plan.Mp // plan.tm, plan.Np // plan.tn, plan.Kp // plan.tk)
    gm, gn, _ = grid

    compiler_params = pltpu.CompilerParams(
        dimension_semantics=("parallel", "parallel", "arbitrary"),
        vmem_limit_bytes=_vmem_limit_bytes(),
    )
    x_bytes = plan.Mp * plan.Kp * xp.dtype.itemsize * gn          # re-read per N tile
    w_bytes = plan.Kp * plan.Np * params.wt.dtype.itemsize * gm   # re-read per M tile
    o_bytes = plan.Mp * plan.Np * jnp.dtype(out_dtype).itemsize
    b_bytes = plan.Np * 4
    m_bytes = plan.Mp * plan.Np * 4 if training else 0
    cost = pl.CostEstimate(
        flops=2 * plan.Mp * plan.Np * plan.Kp,
        transcendentals=0,
        bytes_accessed=x_bytes + w_bytes + o_bytes + b_bytes + m_bytes,
    )

    out_shape = jax.ShapeDtypeStruct((plan.Mp, plan.Np), out_dtype)
    scratch = [pltpu.VMEM((plan.tm, plan.tn), jnp.float32)]

    x_spec = pl.BlockSpec((plan.tm, plan.tk), lambda i, j, k: (i, k))
    w_spec = pl.BlockSpec((plan.tk, plan.tn), lambda i, j, k: (k, j))
    b_spec = pl.BlockSpec((1, plan.tn), lambda i, j, k: (0, j))
    o_spec = pl.BlockSpec((plan.tm, plan.tn), lambda i, j, k: (i, j))

    if not training or p == 0.0:
        out = pl.pallas_call(
            _blockfc_eval_kernel,
            out_shape=out_shape,
            grid_spec=pltpu.PrefetchScalarGridSpec(
                num_scalar_prefetch=0,
                grid=grid,
                in_specs=[x_spec, w_spec, b_spec],
                out_specs=o_spec,
                scratch_shapes=scratch,
            ),
            compiler_params=compiler_params,
            cost_estimate=cost,
        )(xp, params.wt, params.b)
    else:
        # Dropout mask precomputed with a stateless jax.random key (no in-kernel
        # hardware PRNG -> works on real TPUs and in the interpret harness, and
        # no correlated per-tile seeding).
        if rng_key is None:
            rng_key = jax.random.PRNGKey(0)
        keep = jax.random.bernoulli(rng_key, 1.0 - p, (plan.Mp, plan.Np))
        scale = jnp.float32(0.0) if p >= 1.0 else jnp.float32(1.0 / (1.0 - p))
        mask = keep.astype(jnp.float32) * scale
        m_spec = pl.BlockSpec((plan.tm, plan.tn), lambda i, j, k: (i, j))

        out = pl.pallas_call(
            _blockfc_train_kernel,
            out_shape=out_shape,
            grid_spec=pltpu.PrefetchScalarGridSpec(
                num_scalar_prefetch=0,
                grid=grid,
                in_specs=[x_spec, w_spec, b_spec, m_spec],
                out_specs=o_spec,
                scratch_shapes=scratch,
            ),
            compiler_params=compiler_params,
            cost_estimate=cost,
        )(xp, params.wt, params.b, mask)

    if plan.Mp != B or plan.Np != out_f:
        out = out[:B, :out_f]
    return out


# --------------------------------------------------------------------------- #
# Self-test
# --------------------------------------------------------------------------- #

if __name__ == "__main__":
    key = jax.random.PRNGKey(0)
    k_x, k_w, k_b, k_d = jax.random.split(key, 4)

    B, in_features, out_features = 8, 32, 64
    bound = 1.0 / (in_features ** 0.5)        # PyTorch default Linear init range
    x = jax.random.normal(k_x, (B, in_features), dtype=jnp.float32)
    weight = jax.random.uniform(k_w, (out_features, in_features),
                                minval=-bound, maxval=bound, dtype=jnp.float32)
    bias = jax.random.uniform(k_b, (out_features,),
                              minval=-bound, maxval=bound, dtype=jnp.float32)

    # Plan + prepared (padded/transposed/bf16) weights computed ONCE and reused.
    plan = make_plan(B, in_features, out_features)
    params = prepare_params(weight, bias, plan)

    # Eval-mode forward (Dropout is identity), matching module.eval().
    y = block_fc(x, weight, bias, training=False, plan=plan, params=params)
    y = jax.block_until_ready(y)

    # Reference check in plain JAX (bf16 operand streaming -> relaxed tolerance).
    y_ref = jnp.maximum(x @ weight.T + bias, 0.0)
    assert y.shape == y_ref.shape
    assert jnp.allclose(y, y_ref, atol=2e-2, rtol=2e-2), "mismatch vs reference"

    # Train-mode forward (Dropout active, p=0.5): kept values are exactly 2x the
    # eval-mode kernel output, dropped values are exactly 0.
    y_tr = block_fc(x, weight, bias, training=True, p=0.5, rng_key=k_d,
                    plan=plan, params=params)
    y_tr = jax.block_until_ready(y_tr)
    assert y_tr.shape == y_ref.shape
    assert bool(jnp.all(jnp.isfinite(y_tr)))
    ok = (y_tr == 0.0) | jnp.isclose(y_tr, 2.0 * y, atol=1e-6, rtol=1e-6)
    assert bool(jnp.all(ok)), "train-mode dropout output inconsistent"
    assert bool(jnp.any(y_tr == 0.0)) and bool(jnp.any(y_tr != 0.0)), \
        "dropout appears inactive"

    print("KERNEL_OK")
</pallas_src>

<mosaic_0001>
module attributes {stable_mosaic.version = 11 : i64} {
  func.func @_blockfc_eval_kernel(%arg0: i32, %arg1: i32, %arg2: i32, %arg3: memref<8x128xbf16, #tpu.memory_space<vmem>>, %arg4: memref<128x128xbf16, #tpu.memory_space<vmem>>, %arg5: memref<1x128xf32, #tpu.memory_space<vmem>>, %arg6: memref<8x128xf32, #tpu.memory_space<vmem>>, %arg7: memref<8x128xf32, #tpu.memory_space<vmem>>) attributes {dimension_semantics = [#tpu.dimension_semantics<parallel>, #tpu.dimension_semantics<parallel>, #tpu.dimension_semantics<arbitrary>], iteration_bounds = array<i64: 1, 1, 1>, scalar_prefetch = 0 : i64, scratch_operands = 1 : i64, tpu.core_type = #tpu.core_type<tc>, window_params = [{transform_indices = @transform_0, window_bounds = array<i64: 8, 128>}, {transform_indices = @transform_1, window_bounds = array<i64: 128, 128>}, {transform_indices = @transform_2, window_bounds = array<i64: 1, 128>}, {transform_indices = @transform_3, window_bounds = array<i64: 8, 128>}]} {
    %c0_i32 = arith.constant 0 : i32
    %0 = arith.cmpi eq, %arg2, %c0_i32 : i32
    %1 = arith.extui %0 : i1 to i32
    %c0_i32_0 = arith.constant 0 : i32
    %2 = arith.cmpi ne, %1, %c0_i32_0 : i32
    scf.if %2 {
      %c0_10 = arith.constant 0 : index
      %c0_11 = arith.constant 0 : index
      %12 = vector.load %arg5[%c0_10, %c0_11] : memref<1x128xf32, #tpu.memory_space<vmem>>, vector<1x128xf32>
      %13 = vector.shape_cast %12 : vector<1x128xf32> to vector<1x128xf32>
      %14 = vector.broadcast %13 : vector<1x128xf32> to vector<8x128xf32>
      %c0_12 = arith.constant 0 : index
      %c0_13 = arith.constant 0 : index
      %15 = vector.load %arg7[%c0_12, %c0_13] : memref<8x128xf32, #tpu.memory_space<vmem>>, vector<8x128xf32>
      tpu.vector_store %arg7[%c0_12, %c0_13], %14 {strides = array<i32>} : memref<8x128xf32, #tpu.memory_space<vmem>>, vector<8x128xf32>,
    } else {
    }
    %c0 = arith.constant 0 : index
    %c0_1 = arith.constant 0 : index
    %3 = vector.load %arg7[%c0, %c0_1] : memref<8x128xf32, #tpu.memory_space<vmem>>, vector<8x128xf32>
    %c0_2 = arith.constant 0 : index
    %c0_3 = arith.constant 0 : index
    %4 = vector.load %arg3[%c0_2, %c0_3] : memref<8x128xbf16, #tpu.memory_space<vmem>>, vector<8x128xbf16>
    %c0_4 = arith.constant 0 : index
    %c0_5 = arith.constant 0 : index
    %5 = vector.load %arg4[%c0_4, %c0_5] : memref<128x128xbf16, #tpu.memory_space<vmem>>, vector<128x128xbf16>
    %cst = arith.constant dense<0.000000e+00> : vector<8x128xf32>
    %6 = tpu.matmul %4, %5, %cst {dimension_numbers = #tpu.dot_dimension_numbers<[1], [0], [0], [1], [0, 0, 1, 1], [], []>} : vector<8x128xbf16>, vector<128x128xbf16>, vector<8x128xf32> -> vector<8x128xf32>
    %7 = arith.addf %3, %6 : vector<8x128xf32>
    %c0_6 = arith.constant 0 : index
    %c0_7 = arith.constant 0 : index
    %8 = vector.load %arg7[%c0_6, %c0_7] : memref<8x128xf32, #tpu.memory_space<vmem>>, vector<8x128xf32>
    tpu.vector_store %arg7[%c0_6, %c0_7], %7 {strides = array<i32>} : memref<8x128xf32, #tpu.memory_space<vmem>>, vector<8x128xf32>,
    %c0_i32_8 = arith.constant 0 : i32
    %9 = arith.cmpi eq, %arg2, %c0_i32_8 : i32
    %10 = arith.extui %9 : i1 to i32
    %c0_i32_9 = arith.constant 0 : i32
    %11 = arith.cmpi ne, %10, %c0_i32_9 : i32
    scf.if %11 {
      %c0_10 = arith.constant 0 : index
      %c0_11 = arith.constant 0 : index
      %12 = vector.load %arg7[%c0_10, %c0_11] : memref<8x128xf32, #tpu.memory_space<vmem>>, vector<8x128xf32>
      %cst_12 = arith.constant 0.000000e+00 : f32
      %13 = vector.broadcast %cst_12 : f32 to vector<8x128xf32>
      %14 = arith.maximumf %12, %13 : vector<8x128xf32>
      %c0_13 = arith.constant 0 : index
      %c0_14 = arith.constant 0 : index
      %15 = vector.load %arg6[%c0_13, %c0_14] : memref<8x128xf32, #tpu.memory_space<vmem>>, vector<8x128xf32>
      tpu.vector_store %arg6[%c0_13, %c0_14], %14 {strides = array<i32>} : memref<8x128xf32, #tpu.memory_space<vmem>>, vector<8x128xf32>,
    } else {
    }
    return
  }
  func.func @transform_0(%arg0: i32, %arg1: i32, %arg2: i32) -> (i32, i32) {
    %c0_i32 = arith.constant 0 : i32
    return %arg0, %arg2 : i32, i32
  }
  func.func @transform_1(%arg0: i32, %arg1: i32, %arg2: i32) -> (i32, i32) {
    %c0_i32 = arith.constant 0 : i32
    return %arg2, %arg1 : i32, i32
  }
  func.func @transform_2(%arg0: i32, %arg1: i32, %arg2: i32) -> (i32, i32) {
    %c0_i32 = arith.constant 0 : i32
    %c0_i32_0 = arith.constant 0 : i32
    return %c0_i32, %arg1 : i32, i32
  }
  func.func @transform_3(%arg0: i32, %arg1: i32, %arg2: i32) -> (i32, i32) {
    %c0_i32 = arith.constant 0 : i32
    return %arg0, %arg1 : i32, i32
  }
}

</mosaic_0001>

<llo_original>
// kernel: tpu_custom_call.1
$region0: #{tpu_custom_call.1}
  #allocation0 [shape = 'u32[]', space=smem, size = 0x4, offset = 0x4, fixed_abs, tag = 'smem constant byte address 0x4 - core index']
  #allocation1 [shape = 'u32[144,128]{1,0:T(1,128)}', space=vmem, size = 0x12000, scoped, tag = 'internal scratch']
  #allocation2 [shape = 'f32[8,128]{1,0:T(8,128)}', space=vmem, size = 0x1000, scoped, tag = 'scratch operand']
  %s0 = inlined_call_operand.hbm [shape: bf16[8,128], index: 0, kind: input, shape index: {}]
  %s1 = inlined_call_operand.hbm [shape: bf16[128,128], index: 1, kind: input, shape index: {}]
  %s2 = inlined_call_operand.vmem [shape: f32[1,128], index: 2, kind: input, shape index: {}]
  %s3 = inlined_call_operand.hbm [shape: f32[8,128], index: 3, kind: output, shape index: {}]
  %s4 = sld [smem:[#allocation0]]
  $region38: #{tpu_custom_call.1} parent=0
    _
  %s6 = ssub.s32 1, %s4
  %s7 = scalar_select 0, %s6, %s4
  $region1: #{tpu_custom_call.1} parent=0
    #allocation3 [shape = 'u8[2048]{0}', space=vmem, size = 0x800, scoped, tag = 'input window, operand 0, single buffered']
    #allocation4 [shape = 's32[1]{0}', space=sflag, size = 0x4, scoped, tag = 'scoped memory for tpu_custom_call.1']
    #allocation5 [shape = 's32[1]{0}', space=sflag, size = 0x4, scoped, tag = 'scoped memory for tpu_custom_call.1']
    #allocation6 [shape = 'u8[32768]{0}', space=vmem, size = 0x8000, scoped, tag = 'input window, operand 1, single buffered']
    #allocation7 [shape = 's32[1]{0}', space=sflag, size = 0x4, scoped, tag = 'scoped memory for tpu_custom_call.1']
    #allocation8 [shape = 'u8[4096]{0}', space=vmem, size = 0x1000, scoped, tag = 'output window, operand 0, single buffered']
    %8 = vsyncpa [#allocation4], 0
    %9 = vsyncpa [#allocation7], 0
    %10 = vsyncpa [#allocation5], 0
    // Predicated region
    $region2: #{tpu_custom_call.1} parent=1 // pred_check
      _
    $region3: #{tpu_custom_call.1} parent=1 // pred_check_branch
      %12 = sbr.rel (0) target = $region5
    $region4: #{tpu_custom_call.1} parent=1 // pred_region
      %s14 = ssub.s32 64, 64
      %15 = vsyncadd [#allocation4], %s14
      %s17 = sshll.u32 [#allocation3], 4
      %s18 = int_to_ptr.vmem [resolvable:$true] %s17
      %20 = dma.hbm_to_vmem [thread:$0]  %s0, 64, %s18, [#allocation4]
    $region5: #{tpu_custom_call.1} parent=1 // pred_fallthru
      _
    // Predicated region
    $region6: #{tpu_custom_call.1} parent=1 // pred_check
      _
    $region7: #{tpu_custom_call.1} parent=1 // pred_check_branch
      %22 = sbr.rel (0) target = $region9
    $region8: #{tpu_custom_call.1} parent=1 // pred_region
      %s24 = ssub.s32 1024, 1024
      %25 = vsyncadd [#allocation7], %s24
      %s26 = sshll.u32 [#allocation6], 4
      %s27 = int_to_ptr.vmem [resolvable:$true] %s26
      %32 = dma.hbm_to_vmem [thread:$0]  %s1, 1024, %s27, [#allocation7], 64, 64, 4
    $region9: #{tpu_custom_call.1} parent=1 // pred_fallthru
      _
    // Predicated region
    $region10: #{tpu_custom_call.1} parent=1 // pred_check
      _
    $region11: #{tpu_custom_call.1} parent=1 // pred_check_branch
      %34 = sbr.rel (0) target = $region13
    $region12: #{tpu_custom_call.1} parent=1 // pred_region
      _
    $region13: #{tpu_custom_call.1} parent=1 // pred_fallthru
      _
    // Predicated region
    $region14: #{tpu_custom_call.1} parent=1 // pred_check
      _
    $region15: #{tpu_custom_call.1} parent=1 // pred_check_branch
      %36 = sbr.rel (0) target = $region17
    $region16: #{tpu_custom_call.1} parent=1 // pred_region
      %37 = dma.done [#allocation4], 64
    $region17: #{tpu_custom_call.1} parent=1 // pred_fallthru
      _
    // Predicated region
    $region18: #{tpu_custom_call.1} parent=1 // pred_check
      _
    $region19: #{tpu_custom_call.1} parent=1 // pred_check_branch
      %39 = sbr.rel (0) target = $region21
    $region20: #{tpu_custom_call.1} parent=1 // pred_region
      %40 = dma.done [#allocation7], 1024
    $region21: #{tpu_custom_call.1} parent=1 // pred_fallthru
      _
    %p42 = scmp.eq.s32.totalorder 0, 0
    // Predicated region
    $region22: #{tpu_custom_call.1} parent=1 // pred_check
      %p43 = pneg %p42
    $region23: #{tpu_custom_call.1} parent=1 // pred_check_branch
      %45 = sbr.rel (%p43) target = $region25
    $region24: #{tpu_custom_call.1} parent=1 // pred_region
      %v46 = vld [vmem:[%s2] sm:$0x1]
      %v48 = vlaneseq
      %v49 = vshrl.u32 %v48, 7
      %v50 = vsub.s32 0, %v49
      %v51 = vrot.slane %v46, %v50
      %53 = vst [vmem:[#allocation2] sm:$0xff] %v51
    $region25: #{tpu_custom_call.1} parent=1 // pred_fallthru
      _
    %v54 = vld [vmem:[#allocation2] sm:$0xff]
    %v55 = vld [vmem:[#allocation3] sm:$0xf]
    %v56 = vld [vmem:[#allocation6] sm:$0xf]
    %v57 = vld [vmem:[#allocation6 + $0x4] sm:$0xf]
    %v58 = vld [vmem:[#allocation6 + $0x8] sm:$0xf]
    %v59 = vld [vmem:[#allocation6 + $0xc] sm:$0xf]
    %v60 = vld [vmem:[#allocation6 + $0x10] sm:$0xf]
    %v61 = vld [vmem:[#allocation6 + $0x14] sm:$0xf]
    %v62 = vld [vmem:[#allocation6 + $0x18] sm:$0xf]
    %v63 = vld [vmem:[#allocation6 + $0x1c] sm:$0xf]
    %v64 = vld [vmem:[#allocation6 + $0x20] sm:$0xf]
    %v65 = vld [vmem:[#allocation6 + $0x24] sm:$0xf]
    %v66 = vld [vmem:[#allocation6 + $0x28] sm:$0xf]
    %v67 = vld [vmem:[#allocation6 + $0x2c] sm:$0xf]
    %v68 = vld [vmem:[#allocation6 + $0x30] sm:$0xf]
    %v69 = vld [vmem:[#allocation6 + $0x34] sm:$0xf]
    %v70 = vld [vmem:[#allocation6 + $0x38] sm:$0xf]
    %v71 = vld [vmem:[#allocation6 + $0x3c] sm:$0xf]
    %v88 = vunpack.c.l.b16 %v56
    %v89 = vunpack.c.l.b16 %v57
    %v90 = vunpack.c.l.b16 %v58
    %v91 = vunpack.c.l.b16 %v59
    %v92 = vunpack.c.l.b16 %v60
    %v93 = vunpack.c.l.b16 %v61
    %v94 = vunpack.c.l.b16 %v62
    %v95 = vunpack.c.l.b16 %v63
    %v96 = vunpack.c.l.b16 %v64
    %v97 = vunpack.c.l.b16 %v65
    %v98 = vunpack.c.l.b16 %v66
    %v99 = vunpack.c.l.b16 %v67
    %v100 = vunpack.c.l.b16 %v68
    %v101 = vunpack.c.l.b16 %v69
    %v102 = vunpack.c.l.b16 %v70
    %v103 = vunpack.c.l.b16 %v71
    %v104 = vpack.c.b16 %v89, %v88
    %v105 = vpack.c.b16 %v91, %v90
    %v106 = vpack.c.b16 %v93, %v92
    %v107 = vpack.c.b16 %v95, %v94
    %v108 = vpack.c.b16 %v97, %v96
    %v109 = vpack.c.b16 %v99, %v98
    %v110 = vpack.c.b16 %v101, %v100
    %v111 = vpack.c.b16 %v103, %v102
    %120 = vmatprep.subr.bf16.mxu0 0
    %121 = vmatpush1.bf16.msra.mxu0 %v104
    %122 = vmatprep.subr.bf16.mxu0 0
    %123 = vmatpush1.bf16.msra.mxu0 %v105
    %124 = vmatprep.subr.bf16.mxu0 0
    %125 = vmatpush1.bf16.msra.mxu0 %v106
    %126 = vmatprep.subr.bf16.mxu0 0
    %127 = vmatpush1.bf16.msra.mxu0 %v107
    %128 = vmatprep.subr.bf16.mxu0 0
    %129 = vmatpush1.bf16.msra.mxu0 %v108
    %130 = vmatprep.subr.bf16.mxu0 0
    %131 = vmatpush1.bf16.msra.mxu0 %v109
    %132 = vmatprep.subr.bf16.mxu0 0
    %133 = vmatpush1.bf16.msra.mxu0 %v110
    %134 = vmatprep.subr.bf16.mxu0 0
    %135 = vmatpush1.bf16.msra.mxu0 %v111
    %136 = vmatprep.subr.bf16.mxu0 0
    %137 = vmatpush1.bf16.msra.mxu0 0
    %138 = vmatprep.subr.bf16.mxu0 0
    %139 = vmatpush1.bf16.msra.mxu0 0
    %140 = vmatprep.subr.bf16.mxu0 0
    %141 = vmatpush1.bf16.msra.mxu0 0
    %142 = vmatprep.subr.bf16.mxu0 0
    %143 = vmatpush1.bf16.msra.mxu0 0
    %144 = vmatprep.subr.bf16.mxu0 0
    %145 = vmatpush1.bf16.msra.mxu0 0
    %146 = vmatprep.subr.bf16.mxu0 0
    %147 = vmatpush1.bf16.msra.mxu0 0
    %148 = vmatprep.subr.bf16.mxu0 0
    %149 = vmatpush1.bf16.msra.mxu0 0
    %150 = vmatprep.subr.bf16.mxu0 0
    %151 = vmatpush1.bf16.msra.mxu0 0
    %152 = vmatprep.mubr.bf16.mxu0 0
    %153 = vmatmul.mubr.bf16.gmra.mrb[0].mxu0 %v55
    %v154 = vpop.f32.mrb[0].mxu0
    %v155 = vadd.f32 0.0, %v154
    %v156 = vpop.f32.mrb[0].mxu0
    %v157 = vpop.f32.mrb[0].mxu0
    %v158 = vpop.f32.mrb[0].mxu0
    %159 = vdwg.mxu0
    %v160 = vadd.f32 %v54, %v155
    %161 = vst [vmem:[#allocation2] sm:$0xff] %v160
    // Predicated region
    $region26: #{tpu_custom_call.1} parent=1 // pred_check
      %p162 = pneg %p42
    $region27: #{tpu_custom_call.1} parent=1 // pred_check_branch
      %164 = sbr.rel (%p162) target = $region29
    $region28: #{tpu_custom_call.1} parent=1 // pred_region
      %v165 = vld [vmem:[#allocation2] sm:$0xff]
      %v166 = vmax.f32 %v165, 0.0
      %167 = vst [vmem:[#allocation8] sm:$0xff] %v166
    $region29: #{tpu_custom_call.1} parent=1 // pred_fallthru
      _
    // Predicated region
    $region30: #{tpu_custom_call.1} parent=1 // pred_check
      _
    $region31: #{tpu_custom_call.1} parent=1 // pred_check_branch
      %169 = sbr.rel (0) target = $region33
    $region32: #{tpu_custom_call.1} parent=1 // pred_region
      %s171 = ssub.s32 128, 128
      %172 = vsyncadd [#allocation5], %s171
      %s174 = sshll.u32 [#allocation8], 4
      %s175 = int_to_ptr.vmem [resolvable:$true] %s174
      %177 = dma.vmem_to_hbm [thread:$0]  %s175, 128, %s3, [#allocation5]
    $region33: #{tpu_custom_call.1} parent=1 // pred_fallthru
      _
    // Predicated region
    $region34: #{tpu_custom_call.1} parent=1 // pred_check
      _
    $region35: #{tpu_custom_call.1} parent=1 // pred_check_branch
      %179 = sbr.rel (0) target = $region37
    $region36: #{tpu_custom_call.1} parent=1 // pred_region
      %180 = dma.done [#allocation5], 128
    $region37: #{tpu_custom_call.1} parent=1 // pred_fallthru
      _
    %181 = vsyncpa [#allocation4], 1
    %182 = vsyncpa [#allocation7], 1
    %183 = vsyncpa [#allocation5], 1

</llo_original>
